<compile_context>
chip_gen: v6e
topology: v6e:2x2x1
jax: 0.10.0
libtpu: 0.0.40
codegen_flags: <defaults>
</compile_context>

<pallas_src>
import functools

import jax
import jax.numpy as jnp
from jax.experimental import pallas as pl
from jax.experimental.pallas import tpu as pltpu

WIDTH = 30
DEPTH = 20


def mymethod_kernel(x_ref, w0t_ref, b0_ref, u_ref, us_ref, hb_ref, wlt_ref,
                    bl_ref, o_ref):
    x = x_ref[...]                                        # (tb, 2) f32

    # fc_start: Linear(2, WIDTH) + ReLU as two broadcast FMAs on the VPU
    # (a 2-deep contraction wastes the MXU and its push/pop latency).
    w0t = w0t_ref[...]                                    # (2, WIDTH)
    h = x[:, 0:1] * w0t[0:1, :] + x[:, 1:2] * w0t[1:2, :] + b0_ref[...]
    h = jnp.maximum(h, 0.0)                               # (tb, WIDTH)

    # 20 HanLayers, unrolled.  us_ref already holds 2*u/||u||, so no norm,
    # sqrt or divide sits on the serial dependency chain.
    U = u_ref[...]                                        # (DEPTH, WIDTH)
    US = us_ref[...]                                      # (DEPTH, WIDTH)
    Hb = hb_ref[...]                                      # (DEPTH, WIDTH)
    for l in range(DEPTH):
        u = U[l:l + 1, :]                                 # (1, WIDTH)
        us = US[l:l + 1, :]                               # (1, WIDTH)
        b = Hb[l:l + 1, :]                                # (1, WIDTH)
        dot = jnp.sum(h * u, axis=-1, keepdims=True)      # (tb, 1) lane reduce
        h = jnp.abs(h - dot * us + b)                     # (tb, WIDTH)

    # fc_last: Linear(WIDTH, 2) with the pre-transposed weight (no in-kernel .T).
    o_ref[...] = (
        jnp.dot(h, wlt_ref[...], preferred_element_type=jnp.float32)
        + bl_ref[...]
    )


@functools.partial(jax.jit, static_argnames=("tile_b",))
def mymethod_forward(x, w0, b0, U, Hb, wl, bl, *, tile_b=1024):
    bs = x.shape[0]

    # Parameter-only preprocessing: done once by XLA outside the kernel.
    w0t = w0.T                                            # (2, WIDTH)
    wlt = wl.T                                            # (WIDTH, 2)
    # Fold the per-layer norm into the reflection vector: US[l] = 2*U[l]/||U[l]||.
    # (An all-zero row still yields NaN, matching the reference 0/0 behaviour.)
    norms = jnp.sqrt(jnp.sum(U * U, axis=1, keepdims=True))   # (DEPTH, 1)
    US = 2.0 * U / norms

    # Batch tiling: one full-batch block for small batches, otherwise 1024-row
    # tiles (multiple of 8 sublanes; ~0.25 MB working set -> fits comfortably
    # in scoped VMEM on v5e/v6e/v7x).
    tb = bs if bs <= tile_b else tile_b
    grid = (pl.cdiv(bs, tb),)

    row_spec = pl.BlockSpec((tb, 2), lambda i: (i, 0))

    def param_spec(shape):
        return pl.BlockSpec(shape, lambda i: (0, 0))

    return pl.pallas_call(
        mymethod_kernel,
        out_shape=jax.ShapeDtypeStruct((bs, 2), jnp.float32),
        grid=grid,
        in_specs=[
            row_spec,                        # x
            param_spec((2, WIDTH)),          # w0^T
            param_spec((1, WIDTH)),          # b0
            param_spec((DEPTH, WIDTH)),      # U
            param_spec((DEPTH, WIDTH)),      # US = 2*U/||U||
            param_spec((DEPTH, WIDTH)),      # Hb
            param_spec((WIDTH, 2)),          # wl^T
            param_spec((1, 2)),              # bl
        ],
        out_specs=row_spec,
        compiler_params=pltpu.CompilerParams(
            dimension_semantics=("parallel",)),
    )(x, w0t, b0, U, US, Hb, wlt, bl)


def xavier_normal(key, shape):
    # PyTorch nn.init.xavier_normal_: std = sqrt(2 / (fan_in + fan_out)), gain=1
    fan_out, fan_in = shape
    std = (2.0 / (fan_in + fan_out)) ** 0.5
    return (std * jax.random.normal(key, shape, dtype=jnp.float32)).astype(jnp.float32)


def make_params(key):
    keys = jax.random.split(key, 2 + 2 * DEPTH)
    # fc_start: Linear(2, WIDTH)
    w0 = xavier_normal(keys[0], (WIDTH, 2))
    b0 = jnp.zeros((1, WIDTH), jnp.float32)
    # HanLayer embeddings: u and b each (1, WIDTH) per layer -> stacked (DEPTH, WIDTH)
    U = jnp.concatenate([xavier_normal(keys[2 + i], (1, WIDTH)) for i in range(DEPTH)], axis=0)
    Hb = jnp.concatenate(
        [xavier_normal(keys[2 + DEPTH + i], (1, WIDTH)) for i in range(DEPTH)], axis=0
    )
    # fc_last: Linear(WIDTH, 2)
    wl = xavier_normal(keys[1], (2, WIDTH))
    bl = jnp.zeros((1, 2), jnp.float32)
    return w0, b0, U, Hb, wl, bl


def reference_forward(x, w0, b0, U, Hb, wl, bl):
    # Matches the PyTorch module exactly (norm recomputed per layer, divide by ||u||).
    h = jnp.maximum(x @ w0.T + b0, 0.0)
    for l in range(DEPTH):
        u = U[l:l + 1, :]
        b = Hb[l:l + 1, :]
        norm = jnp.sqrt(jnp.sum(u * u))
        dot = jnp.sum(h * u, axis=-1, keepdims=True)
        h = jnp.abs(h - 2.0 * dot / norm * u + b)
    return h @ wl.T + bl


if __name__ == "__main__":
    key = jax.random.PRNGKey(0)
    k_params, k_x = jax.random.split(key)
    params = make_params(k_params)

    batch = 8
    x = jax.random.normal(k_x, (batch, 2), dtype=jnp.float32)

    out = mymethod_forward(x, *params)
    out = jax.block_until_ready(out)

    ref = reference_forward(x, *params)
    assert out.shape == (batch, 2)
    assert jnp.allclose(out, ref, atol=1e-5, rtol=1e-5)

    print("KERNEL_OK")
</pallas_src>

<mosaic_0001>
module attributes {stable_mosaic.version = 11 : i64} {
  func.func @mymethod_kernel(%arg0: i32, %arg1: memref<8x2xf32, #tpu.memory_space<vmem>>, %arg2: memref<2x30xf32, #tpu.memory_space<vmem>>, %arg3: memref<1x30xf32, #tpu.memory_space<vmem>>, %arg4: memref<20x30xf32, #tpu.memory_space<vmem>>, %arg5: memref<20x30xf32, #tpu.memory_space<vmem>>, %arg6: memref<20x30xf32, #tpu.memory_space<vmem>>, %arg7: memref<30x2xf32, #tpu.memory_space<vmem>>, %arg8: memref<1x2xf32, #tpu.memory_space<vmem>>, %arg9: memref<8x2xf32, #tpu.memory_space<vmem>>) attributes {dimension_semantics = [#tpu.dimension_semantics<parallel>], iteration_bounds = array<i64: 1>, scalar_prefetch = 0 : i64, scratch_operands = 0 : i64, tpu.core_type = #tpu.core_type<tc>, window_params = [{transform_indices = @transform_0, window_bounds = array<i64: 8, 2>}, {pipeline_mode = #tpu.pipeline_mode<synchronous>, transform_indices = @transform_1, window_bounds = array<i64: 2, 30>}, {pipeline_mode = #tpu.pipeline_mode<synchronous>, transform_indices = @transform_2, window_bounds = array<i64: 1, 30>}, {pipeline_mode = #tpu.pipeline_mode<synchronous>, transform_indices = @transform_3, window_bounds = array<i64: 20, 30>}, {pipeline_mode = #tpu.pipeline_mode<synchronous>, transform_indices = @transform_4, window_bounds = array<i64: 20, 30>}, {pipeline_mode = #tpu.pipeline_mode<synchronous>, transform_indices = @transform_5, window_bounds = array<i64: 20, 30>}, {pipeline_mode = #tpu.pipeline_mode<synchronous>, transform_indices = @transform_6, window_bounds = array<i64: 30, 2>}, {pipeline_mode = #tpu.pipeline_mode<synchronous>, transform_indices = @transform_7, window_bounds = array<i64: 1, 2>}, {transform_indices = @transform_8, window_bounds = array<i64: 8, 2>}]} {
    %c0 = arith.constant 0 : index
    %c0_0 = arith.constant 0 : index
    %0 = vector.load %arg1[%c0, %c0_0] : memref<8x2xf32, #tpu.memory_space<vmem>>, vector<8x2xf32>
    %c0_1 = arith.constant 0 : index
    %c0_2 = arith.constant 0 : index
    %1 = vector.load %arg2[%c0_1, %c0_2] : memref<2x30xf32, #tpu.memory_space<vmem>>, vector<2x30xf32>
    %2 = vector.extract_strided_slice %0 {offsets = [0, 0], sizes = [8, 1], strides = [1, 1]} : vector<8x2xf32> to vector<8x1xf32>
    %3 = vector.extract_strided_slice %1 {offsets = [0, 0], sizes = [1, 30], strides = [1, 1]} : vector<2x30xf32> to vector<1x30xf32>
    %4 = vector.broadcast %2 : vector<8x1xf32> to vector<8x30xf32>
    %5 = vector.broadcast %3 : vector<1x30xf32> to vector<8x30xf32>
    %6 = arith.mulf %4, %5 : vector<8x30xf32>
    %7 = vector.extract_strided_slice %0 {offsets = [0, 1], sizes = [8, 1], strides = [1, 1]} : vector<8x2xf32> to vector<8x1xf32>
    %8 = vector.extract_strided_slice %1 {offsets = [1, 0], sizes = [1, 30], strides = [1, 1]} : vector<2x30xf32> to vector<1x30xf32>
    %9 = vector.broadcast %7 : vector<8x1xf32> to vector<8x30xf32>
    %10 = vector.broadcast %8 : vector<1x30xf32> to vector<8x30xf32>
    %11 = arith.mulf %9, %10 : vector<8x30xf32>
    %12 = arith.addf %6, %11 : vector<8x30xf32>
    %c0_3 = arith.constant 0 : index
    %c0_4 = arith.constant 0 : index
    %13 = vector.load %arg3[%c0_3, %c0_4] : memref<1x30xf32, #tpu.memory_space<vmem>>, vector<1x30xf32>
    %14 = vector.broadcast %13 : vector<1x30xf32> to vector<8x30xf32>
    %15 = arith.addf %12, %14 : vector<8x30xf32>
    %cst = arith.constant 0.000000e+00 : f32
    %16 = vector.broadcast %cst : f32 to vector<8x30xf32>
    %17 = arith.maximumf %15, %16 : vector<8x30xf32>
    %c0_5 = arith.constant 0 : index
    %c0_6 = arith.constant 0 : index
    %18 = vector.load %arg4[%c0_5, %c0_6] : memref<20x30xf32, #tpu.memory_space<vmem>>, vector<20x30xf32>
    %c0_7 = arith.constant 0 : index
    %c0_8 = arith.constant 0 : index
    %19 = vector.load %arg5[%c0_7, %c0_8] : memref<20x30xf32, #tpu.memory_space<vmem>>, vector<20x30xf32>
    %c0_9 = arith.constant 0 : index
    %c0_10 = arith.constant 0 : index
    %20 = vector.load %arg6[%c0_9, %c0_10] : memref<20x30xf32, #tpu.memory_space<vmem>>, vector<20x30xf32>
    %21 = vector.extract_strided_slice %18 {offsets = [0, 0], sizes = [1, 30], strides = [1, 1]} : vector<20x30xf32> to vector<1x30xf32>
    %22 = vector.extract_strided_slice %19 {offsets = [0, 0], sizes = [1, 30], strides = [1, 1]} : vector<20x30xf32> to vector<1x30xf32>
    %23 = vector.extract_strided_slice %20 {offsets = [0, 0], sizes = [1, 30], strides = [1, 1]} : vector<20x30xf32> to vector<1x30xf32>
    %24 = vector.broadcast %21 : vector<1x30xf32> to vector<8x30xf32>
    %25 = arith.mulf %17, %24 : vector<8x30xf32>
    %cst_11 = arith.constant dense<0.000000e+00> : vector<8xf32>
    %26 = vector.multi_reduction <add>, %25, %cst_11 [1] : vector<8x30xf32> to vector<8xf32>
    %27 = vector.shape_cast %26 : vector<8xf32> to vector<8x1xf32>
    %28 = vector.broadcast %27 : vector<8x1xf32> to vector<8x30xf32>
    %29 = vector.broadcast %22 : vector<1x30xf32> to vector<8x30xf32>
    %30 = arith.mulf %28, %29 : vector<8x30xf32>
    %31 = arith.subf %17, %30 : vector<8x30xf32>
    %32 = vector.broadcast %23 : vector<1x30xf32> to vector<8x30xf32>
    %33 = arith.addf %31, %32 : vector<8x30xf32>
    %34 = math.absf %33 : vector<8x30xf32>
    %35 = vector.extract_strided_slice %18 {offsets = [1, 0], sizes = [1, 30], strides = [1, 1]} : vector<20x30xf32> to vector<1x30xf32>
    %36 = vector.extract_strided_slice %19 {offsets = [1, 0], sizes = [1, 30], strides = [1, 1]} : vector<20x30xf32> to vector<1x30xf32>
    %37 = vector.extract_strided_slice %20 {offsets = [1, 0], sizes = [1, 30], strides = [1, 1]} : vector<20x30xf32> to vector<1x30xf32>
    %38 = vector.broadcast %35 : vector<1x30xf32> to vector<8x30xf32>
    %39 = arith.mulf %34, %38 : vector<8x30xf32>
    %cst_12 = arith.constant dense<0.000000e+00> : vector<8xf32>
    %40 = vector.multi_reduction <add>, %39, %cst_12 [1] : vector<8x30xf32> to vector<8xf32>
    %41 = vector.shape_cast %40 : vector<8xf32> to vector<8x1xf32>
    %42 = vector.broadcast %41 : vector<8x1xf32> to vector<8x30xf32>
    %43 = vector.broadcast %36 : vector<1x30xf32> to vector<8x30xf32>
    %44 = arith.mulf %42, %43 : vector<8x30xf32>
    %45 = arith.subf %34, %44 : vector<8x30xf32>
    %46 = vector.broadcast %37 : vector<1x30xf32> to vector<8x30xf32>
    %47 = arith.addf %45, %46 : vector<8x30xf32>
    %48 = math.absf %47 : vector<8x30xf32>
    %49 = vector.extract_strided_slice %18 {offsets = [2, 0], sizes = [1, 30], strides = [1, 1]} : vector<20x30xf32> to vector<1x30xf32>
    %50 = vector.extract_strided_slice %19 {offsets = [2, 0], sizes = [1, 30], strides = [1, 1]} : vector<20x30xf32> to vector<1x30xf32>
    %51 = vector.extract_strided_slice %20 {offsets = [2, 0], sizes = [1, 30], strides = [1, 1]} : vector<20x30xf32> to vector<1x30xf32>
    %52 = vector.broadcast %49 : vector<1x30xf32> to vector<8x30xf32>
    %53 = arith.mulf %48, %52 : vector<8x30xf32>
    %cst_13 = arith.constant dense<0.000000e+00> : vector<8xf32>
    %54 = vector.multi_reduction <add>, %53, %cst_13 [1] : vector<8x30xf32> to vector<8xf32>
    %55 = vector.shape_cast %54 : vector<8xf32> to vector<8x1xf32>
    %56 = vector.broadcast %55 : vector<8x1xf32> to vector<8x30xf32>
    %57 = vector.broadcast %50 : vector<1x30xf32> to vector<8x30xf32>
    %58 = arith.mulf %56, %57 : vector<8x30xf32>
    %59 = arith.subf %48, %58 : vector<8x30xf32>
    %60 = vector.broadcast %51 : vector<1x30xf32> to vector<8x30xf32>
    %61 = arith.addf %59, %60 : vector<8x30xf32>
    %62 = math.absf %61 : vector<8x30xf32>
    %63 = vector.extract_strided_slice %18 {offsets = [3, 0], sizes = [1, 30], strides = [1, 1]} : vector<20x30xf32> to vector<1x30xf32>
    %64 = vector.extract_strided_slice %19 {offsets = [3, 0], sizes = [1, 30], strides = [1, 1]} : vector<20x30xf32> to vector<1x30xf32>
    %65 = vector.extract_strided_slice %20 {offsets = [3, 0], sizes = [1, 30], strides = [1, 1]} : vector<20x30xf32> to vector<1x30xf32>
    %66 = vector.broadcast %63 : vector<1x30xf32> to vector<8x30xf32>
    %67 = arith.mulf %62, %66 : vector<8x30xf32>
    %cst_14 = arith.constant dense<0.000000e+00> : vector<8xf32>
    %68 = vector.multi_reduction <add>, %67, %cst_14 [1] : vector<8x30xf32> to vector<8xf32>
    %69 = vector.shape_cast %68 : vector<8xf32> to vector<8x1xf32>
    %70 = vector.broadcast %69 : vector<8x1xf32> to vector<8x30xf32>
    %71 = vector.broadcast %64 : vector<1x30xf32> to vector<8x30xf32>
    %72 = arith.mulf %70, %71 : vector<8x30xf32>
    %73 = arith.subf %62, %72 : vector<8x30xf32>
    %74 = vector.broadcast %65 : vector<1x30xf32> to vector<8x30xf32>
    %75 = arith.addf %73, %74 : vector<8x30xf32>
    %76 = math.absf %75 : vector<8x30xf32>
    %77 = vector.extract_strided_slice %18 {offsets = [4, 0], sizes = [1, 30], strides = [1, 1]} : vector<20x30xf32> to vector<1x30xf32>
    %78 = vector.extract_strided_slice %19 {offsets = [4, 0], sizes = [1, 30], strides = [1, 1]} : vector<20x30xf32> to vector<1x30xf32>
    %79 = vector.extract_strided_slice %20 {offsets = [4, 0], sizes = [1, 30], strides = [1, 1]} : vector<20x30xf32> to vector<1x30xf32>
    %80 = vector.broadcast %77 : vector<1x30xf32> to vector<8x30xf32>
    %81 = arith.mulf %76, %80 : vector<8x30xf32>
    %cst_15 = arith.constant dense<0.000000e+00> : vector<8xf32>
    %82 = vector.multi_reduction <add>, %81, %cst_15 [1] : vector<8x30xf32> to vector<8xf32>
    %83 = vector.shape_cast %82 : vector<8xf32> to vector<8x1xf32>
    %84 = vector.broadcast %83 : vector<8x1xf32> to vector<8x30xf32>
    %85 = vector.broadcast %78 : vector<1x30xf32> to vector<8x30xf32>
    %86 = arith.mulf %84, %85 : vector<8x30xf32>
    %87 = arith.subf %76, %86 : vector<8x30xf32>
    %88 = vector.broadcast %79 : vector<1x30xf32> to vector<8x30xf32>
    %89 = arith.addf %87, %88 : vector<8x30xf32>
    %90 = math.absf %89 : vector<8x30xf32>
    %91 = vector.extract_strided_slice %18 {offsets = [5, 0], sizes = [1, 30], strides = [1, 1]} : vector<20x30xf32> to vector<1x30xf32>
    %92 = vector.extract_strided_slice %19 {offsets = [5, 0], sizes = [1, 30], strides = [1, 1]} : vector<20x30xf32> to vector<1x30xf32>
    %93 = vector.extract_strided_slice %20 {offsets = [5, 0], sizes = [1, 30], strides = [1, 1]} : vector<20x30xf32> to vector<1x30xf32>
    %94 = vector.broadcast %91 : vector<1x30xf32> to vector<8x30xf32>
    %95 = arith.mulf %90, %94 : vector<8x30xf32>
    %cst_16 = arith.constant dense<0.000000e+00> : vector<8xf32>
    %96 = vector.multi_reduction <add>, %95, %cst_16 [1] : vector<8x30xf32> to vector<8xf32>
    %97 = vector.shape_cast %96 : vector<8xf32> to vector<8x1xf32>
    %98 = vector.broadcast %97 : vector<8x1xf32> to vector<8x30xf32>
    %99 = vector.broadcast %92 : vector<1x30xf32> to vector<8x30xf32>
    %100 = arith.mulf %98, %99 : vector<8x30xf32>
    %101 = arith.subf %90, %100 : vector<8x30xf32>
    %102 = vector.broadcast %93 : vector<1x30xf32> to vector<8x30xf32>
    %103 = arith.addf %101, %102 : vector<8x30xf32>
    %104 = math.absf %103 : vector<8x30xf32>
    %105 = vector.extract_strided_slice %18 {offsets = [6, 0], sizes = [1, 30], strides = [1, 1]} : vector<20x30xf32> to vector<1x30xf32>
    %106 = vector.extract_strided_slice %19 {offsets = [6, 0], sizes = [1, 30], strides = [1, 1]} : vector<20x30xf32> to vector<1x30xf32>
    %107 = vector.extract_strided_slice %20 {offsets = [6, 0], sizes = [1, 30], strides = [1, 1]} : vector<20x30xf32> to vector<1x30xf32>
    %108 = vector.broadcast %105 : vector<1x30xf32> to vector<8x30xf32>
    %109 = arith.mulf %104, %108 : vector<8x30xf32>
    %cst_17 = arith.constant dense<0.000000e+00> : vector<8xf32>
    %110 = vector.multi_reduction <add>, %109, %cst_17 [1] : vector<8x30xf32> to vector<8xf32>
    %111 = vector.shape_cast %110 : vector<8xf32> to vector<8x1xf32>
    %112 = vector.broadcast %111 : vector<8x1xf32> to vector<8x30xf32>
    %113 = vector.broadcast %106 : vector<1x30xf32> to vector<8x30xf32>
    %114 = arith.mulf %112, %113 : vector<8x30xf32>
    %115 = arith.subf %104, %114 : vector<8x30xf32>
    %116 = vector.broadcast %107 : vector<1x30xf32> to vector<8x30xf32>
    %117 = arith.addf %115, %116 : vector<8x30xf32>
    %118 = math.absf %117 : vector<8x30xf32>
    %119 = vector.extract_strided_slice %18 {offsets = [7, 0], sizes = [1, 30], strides = [1, 1]} : vector<20x30xf32> to vector<1x30xf32>
    %120 = vector.extract_strided_slice %19 {offsets = [7, 0], sizes = [1, 30], strides = [1, 1]} : vector<20x30xf32> to vector<1x30xf32>
    %121 = vector.extract_strided_slice %20 {offsets = [7, 0], sizes = [1, 30], strides = [1, 1]} : vector<20x30xf32> to vector<1x30xf32>
    %122 = vector.broadcast %119 : vector<1x30xf32> to vector<8x30xf32>
    %123 = arith.mulf %118, %122 : vector<8x30xf32>
    %cst_18 = arith.constant dense<0.000000e+00> : vector<8xf32>
    %124 = vector.multi_reduction <add>, %123, %cst_18 [1] : vector<8x30xf32> to vector<8xf32>
    %125 = vector.shape_cast %124 : vector<8xf32> to vector<8x1xf32>
    %126 = vector.broadcast %125 : vector<8x1xf32> to vector<8x30xf32>
    %127 = vector.broadcast %120 : vector<1x30xf32> to vector<8x30xf32>
    %128 = arith.mulf %126, %127 : vector<8x30xf32>
    %129 = arith.subf %118, %128 : vector<8x30xf32>
    %130 = vector.broadcast %121 : vector<1x30xf32> to vector<8x30xf32>
    %131 = arith.addf %129, %130 : vector<8x30xf32>
    %132 = math.absf %131 : vector<8x30xf32>
    %133 = vector.extract_strided_slice %18 {offsets = [8, 0], sizes = [1, 30], strides = [1, 1]} : vector<20x30xf32> to vector<1x30xf32>
    %134 = vector.extract_strided_slice %19 {offsets = [8, 0], sizes = [1, 30], strides = [1, 1]} : vector<20x30xf32> to vector<1x30xf32>
    %135 = vector.extract_strided_slice %20 {offsets = [8, 0], sizes = [1, 30], strides = [1, 1]} : vector<20x30xf32> to vector<1x30xf32>
    %136 = vector.broadcast %133 : vector<1x30xf32> to vector<8x30xf32>
    %137 = arith.mulf %132, %136 : vector<8x30xf32>
    %cst_19 = arith.constant dense<0.000000e+00> : vector<8xf32>
    %138 = vector.multi_reduction <add>, %137, %cst_19 [1] : vector<8x30xf32> to vector<8xf32>
    %139 = vector.shape_cast %138 : vector<8xf32> to vector<8x1xf32>
    %140 = vector.broadcast %139 : vector<8x1xf32> to vector<8x30xf32>
    %141 = vector.broadcast %134 : vector<1x30xf32> to vector<8x30xf32>
    %142 = arith.mulf %140, %141 : vector<8x30xf32>
    %143 = arith.subf %132, %142 : vector<8x30xf32>
    %144 = vector.broadcast %135 : vector<1x30xf32> to vector<8x30xf32>
    %145 = arith.addf %143, %144 : vector<8x30xf32>
    %146 = math.absf %145 : vector<8x30xf32>
    %147 = vector.extract_strided_slice %18 {offsets = [9, 0], sizes = [1, 30], strides = [1, 1]} : vector<20x30xf32> to vector<1x30xf32>
    %148 = vector.extract_strided_slice %19 {offsets = [9, 0], sizes = [1, 30], strides = [1, 1]} : vector<20x30xf32> to vector<1x30xf32>
    %149 = vector.extract_strided_slice %20 {offsets = [9, 0], sizes = [1, 30], strides = [1, 1]} : vector<20x30xf32> to vector<1x30xf32>
    %150 = vector.broadcast %147 : vector<1x30xf32> to vector<8x30xf32>
    %151 = arith.mulf %146, %150 : vector<8x30xf32>
    %cst_20 = arith.constant dense<0.000000e+00> : vector<8xf32>
    %152 = vector.multi_reduction <add>, %151, %cst_20 [1] : vector<8x30xf32> to vector<8xf32>
    %153 = vector.shape_cast %152 : vector<8xf32> to vector<8x1xf32>
    %154 = vector.broadcast %153 : vector<8x1xf32> to vector<8x30xf32>
    %155 = vector.broadcast %148 : vector<1x30xf32> to vector<8x30xf32>
    %156 = arith.mulf %154, %155 : vector<8x30xf32>
    %157 = arith.subf %146, %156 : vector<8x30xf32>
    %158 = vector.broadcast %149 : vector<1x30xf32> to vector<8x30xf32>
    %159 = arith.addf %157, %158 : vector<8x30xf32>
    %160 = math.absf %159 : vector<8x30xf32>
    %161 = vector.extract_strided_slice %18 {offsets = [10, 0], sizes = [1, 30], strides = [1, 1]} : vector<20x30xf32> to vector<1x30xf32>
    %162 = vector.extract_strided_slice %19 {offsets = [10, 0], sizes = [1, 30], strides = [1, 1]} : vector<20x30xf32> to vector<1x30xf32>
    %163 = vector.extract_strided_slice %20 {offsets = [10, 0], sizes = [1, 30], strides = [1, 1]} : vector<20x30xf32> to vector<1x30xf32>
    %164 = vector.broadcast %161 : vector<1x30xf32> to vector<8x30xf32>
    %165 = arith.mulf %160, %164 : vector<8x30xf32>
    %cst_21 = arith.constant dense<0.000000e+00> : vector<8xf32>
    %166 = vector.multi_reduction <add>, %165, %cst_21 [1] : vector<8x30xf32> to vector<8xf32>
    %167 = vector.shape_cast %166 : vector<8xf32> to vector<8x1xf32>
    %168 = vector.broadcast %167 : vector<8x1xf32> to vector<8x30xf32>
    %169 = vector.broadcast %162 : vector<1x30xf32> to vector<8x30xf32>
    %170 = arith.mulf %168, %169 : vector<8x30xf32>
    %171 = arith.subf %160, %170 : vector<8x30xf32>
    %172 = vector.broadcast %163 : vector<1x30xf32> to vector<8x30xf32>
    %173 = arith.addf %171, %172 : vector<8x30xf32>
    %174 = math.absf %173 : vector<8x30xf32>
    %175 = vector.extract_strided_slice %18 {offsets = [11, 0], sizes = [1, 30], strides = [1, 1]} : vector<20x30xf32> to vector<1x30xf32>
    %176 = vector.extract_strided_slice %19 {offsets = [11, 0], sizes = [1, 30], strides = [1, 1]} : vector<20x30xf32> to vector<1x30xf32>
    %177 = vector.extract_strided_slice %20 {offsets = [11, 0], sizes = [1, 30], strides = [1, 1]} : vector<20x30xf32> to vector<1x30xf32>
    %178 = vector.broadcast %175 : vector<1x30xf32> to vector<8x30xf32>
    %179 = arith.mulf %174, %178 : vector<8x30xf32>
    %cst_22 = arith.constant dense<0.000000e+00> : vector<8xf32>
    %180 = vector.multi_reduction <add>, %179, %cst_22 [1] : vector<8x30xf32> to vector<8xf32>
    %181 = vector.shape_cast %180 : vector<8xf32> to vector<8x1xf32>
    %182 = vector.broadcast %181 : vector<8x1xf32> to vector<8x30xf32>
    %183 = vector.broadcast %176 : vector<1x30xf32> to vector<8x30xf32>
    %184 = arith.mulf %182, %183 : vector<8x30xf32>
    %185 = arith.subf %174, %184 : vector<8x30xf32>
    %186 = vector.broadcast %177 : vector<1x30xf32> to vector<8x30xf32>
    %187 = arith.addf %185, %186 : vector<8x30xf32>
    %188 = math.absf %187 : vector<8x30xf32>
    %189 = vector.extract_strided_slice %18 {offsets = [12, 0], sizes = [1, 30], strides = [1, 1]} : vector<20x30xf32> to vector<1x30xf32>
    %190 = vector.extract_strided_slice %19 {offsets = [12, 0], sizes = [1, 30], strides = [1, 1]} : vector<20x30xf32> to vector<1x30xf32>
    %191 = vector.extract_strided_slice %20 {offsets = [12, 0], sizes = [1, 30], strides = [1, 1]} : vector<20x30xf32> to vector<1x30xf32>
    %192 = vector.broadcast %189 : vector<1x30xf32> to vector<8x30xf32>
    %193 = arith.mulf %188, %192 : vector<8x30xf32>
    %cst_23 = arith.constant dense<0.000000e+00> : vector<8xf32>
    %194 = vector.multi_reduction <add>, %193, %cst_23 [1] : vector<8x30xf32> to vector<8xf32>
    %195 = vector.shape_cast %194 : vector<8xf32> to vector<8x1xf32>
    %196 = vector.broadcast %195 : vector<8x1xf32> to vector<8x30xf32>
    %197 = vector.broadcast %190 : vector<1x30xf32> to vector<8x30xf32>
    %198 = arith.mulf %196, %197 : vector<8x30xf32>
    %199 = arith.subf %188, %198 : vector<8x30xf32>
    %200 = vector.broadcast %191 : vector<1x30xf32> to vector<8x30xf32>
    %201 = arith.addf %199, %200 : vector<8x30xf32>
    %202 = math.absf %201 : vector<8x30xf32>
    %203 = vector.extract_strided_slice %18 {offsets = [13, 0], sizes = [1, 30], strides = [1, 1]} : vector<20x30xf32> to vector<1x30xf32>
    %204 = vector.extract_strided_slice %19 {offsets = [13, 0], sizes = [1, 30], strides = [1, 1]} : vector<20x30xf32> to vector<1x30xf32>
    %205 = vector.extract_strided_slice %20 {offsets = [13, 0], sizes = [1, 30], strides = [1, 1]} : vector<20x30xf32> to vector<1x30xf32>
    %206 = vector.broadcast %203 : vector<1x30xf32> to vector<8x30xf32>
    %207 = arith.mulf %202, %206 : vector<8x30xf32>
    %cst_24 = arith.constant dense<0.000000e+00> : vector<8xf32>
    %208 = vector.multi_reduction <add>, %207, %cst_24 [1] : vector<8x30xf32> to vector<8xf32>
    %209 = vector.shape_cast %208 : vector<8xf32> to vector<8x1xf32>
    %210 = vector.broadcast %209 : vector<8x1xf32> to vector<8x30xf32>
    %211 = vector.broadcast %204 : vector<1x30xf32> to vector<8x30xf32>
    %212 = arith.mulf %210, %211 : vector<8x30xf32>
    %213 = arith.subf %202, %212 : vector<8x30xf32>
    %214 = vector.broadcast %205 : vector<1x30xf32> to vector<8x30xf32>
    %215 = arith.addf %213, %214 : vector<8x30xf32>
    %216 = math.absf %215 : vector<8x30xf32>
    %217 = vector.extract_strided_slice %18 {offsets = [14, 0], sizes = [1, 30], strides = [1, 1]} : vector<20x30xf32> to vector<1x30xf32>
    %218 = vector.extract_strided_slice %19 {offsets = [14, 0], sizes = [1, 30], strides = [1, 1]} : vector<20x30xf32> to vector<1x30xf32>
    %219 = vector.extract_strided_slice %20 {offsets = [14, 0], sizes = [1, 30], strides = [1, 1]} : vector<20x30xf32> to vector<1x30xf32>
    %220 = vector.broadcast %217 : vector<1x30xf32> to vector<8x30xf32>
    %221 = arith.mulf %216, %220 : vector<8x30xf32>
    %cst_25 = arith.constant dense<0.000000e+00> : vector<8xf32>
    %222 = vector.multi_reduction <add>, %221, %cst_25 [1] : vector<8x30xf32> to vector<8xf32>
    %223 = vector.shape_cast %222 : vector<8xf32> to vector<8x1xf32>
    %224 = vector.broadcast %223 : vector<8x1xf32> to vector<8x30xf32>
    %225 = vector.broadcast %218 : vector<1x30xf32> to vector<8x30xf32>
    %226 = arith.mulf %224, %225 : vector<8x30xf32>
    %227 = arith.subf %216, %226 : vector<8x30xf32>
    %228 = vector.broadcast %219 : vector<1x30xf32> to vector<8x30xf32>
    %229 = arith.addf %227, %228 : vector<8x30xf32>
    %230 = math.absf %229 : vector<8x30xf32>
    %231 = vector.extract_strided_slice %18 {offsets = [15, 0], sizes = [1, 30], strides = [1, 1]} : vector<20x30xf32> to vector<1x30xf32>
    %232 = vector.extract_strided_slice %19 {offsets = [15, 0], sizes = [1, 30], strides = [1, 1]} : vector<20x30xf32> to vector<1x30xf32>
    %233 = vector.extract_strided_slice %20 {offsets = [15, 0], sizes = [1, 30], strides = [1, 1]} : vector<20x30xf32> to vector<1x30xf32>
    %234 = vector.broadcast %231 : vector<1x30xf32> to vector<8x30xf32>
    %235 = arith.mulf %230, %234 : vector<8x30xf32>
    %cst_26 = arith.constant dense<0.000000e+00> : vector<8xf32>
    %236 = vector.multi_reduction <add>, %235, %cst_26 [1] : vector<8x30xf32> to vector<8xf32>
    %237 = vector.shape_cast %236 : vector<8xf32> to vector<8x1xf32>
    %238 = vector.broadcast %237 : vector<8x1xf32> to vector<8x30xf32>
    %239 = vector.broadcast %232 : vector<1x30xf32> to vector<8x30xf32>
    %240 = arith.mulf %238, %239 : vector<8x30xf32>
    %241 = arith.subf %230, %240 : vector<8x30xf32>
    %242 = vector.broadcast %233 : vector<1x30xf32> to vector<8x30xf32>
    %243 = arith.addf %241, %242 : vector<8x30xf32>
    %244 = math.absf %243 : vector<8x30xf32>
    %245 = vector.extract_strided_slice %18 {offsets = [16, 0], sizes = [1, 30], strides = [1, 1]} : vector<20x30xf32> to vector<1x30xf32>
    %246 = vector.extract_strided_slice %19 {offsets = [16, 0], sizes = [1, 30], strides = [1, 1]} : vector<20x30xf32> to vector<1x30xf32>
    %247 = vector.extract_strided_slice %20 {offsets = [16, 0], sizes = [1, 30], strides = [1, 1]} : vector<20x30xf32> to vector<1x30xf32>
    %248 = vector.broadcast %245 : vector<1x30xf32> to vector<8x30xf32>
    %249 = arith.mulf %244, %248 : vector<8x30xf32>
    %cst_27 = arith.constant dense<0.000000e+00> : vector<8xf32>
    %250 = vector.multi_reduction <add>, %249, %cst_27 [1] : vector<8x30xf32> to vector<8xf32>
    %251 = vector.shape_cast %250 : vector<8xf32> to vector<8x1xf32>
    %252 = vector.broadcast %251 : vector<8x1xf32> to vector<8x30xf32>
    %253 = vector.broadcast %246 : vector<1x30xf32> to vector<8x30xf32>
    %254 = arith.mulf %252, %253 : vector<8x30xf32>
    %255 = arith.subf %244, %254 : vector<8x30xf32>
    %256 = vector.broadcast %247 : vector<1x30xf32> to vector<8x30xf32>
    %257 = arith.addf %255, %256 : vector<8x30xf32>
    %258 = math.absf %257 : vector<8x30xf32>
    %259 = vector.extract_strided_slice %18 {offsets = [17, 0], sizes = [1, 30], strides = [1, 1]} : vector<20x30xf32> to vector<1x30xf32>
    %260 = vector.extract_strided_slice %19 {offsets = [17, 0], sizes = [1, 30], strides = [1, 1]} : vector<20x30xf32> to vector<1x30xf32>
    %261 = vector.extract_strided_slice %20 {offsets = [17, 0], sizes = [1, 30], strides = [1, 1]} : vector<20x30xf32> to vector<1x30xf32>
    %262 = vector.broadcast %259 : vector<1x30xf32> to vector<8x30xf32>
    %263 = arith.mulf %258, %262 : vector<8x30xf32>
    %cst_28 = arith.constant dense<0.000000e+00> : vector<8xf32>
    %264 = vector.multi_reduction <add>, %263, %cst_28 [1] : vector<8x30xf32> to vector<8xf32>
    %265 = vector.shape_cast %264 : vector<8xf32> to vector<8x1xf32>
    %266 = vector.broadcast %265 : vector<8x1xf32> to vector<8x30xf32>
    %267 = vector.broadcast %260 : vector<1x30xf32> to vector<8x30xf32>
    %268 = arith.mulf %266, %267 : vector<8x30xf32>
    %269 = arith.subf %258, %268 : vector<8x30xf32>
    %270 = vector.broadcast %261 : vector<1x30xf32> to vector<8x30xf32>
    %271 = arith.addf %269, %270 : vector<8x30xf32>
    %272 = math.absf %271 : vector<8x30xf32>
    %273 = vector.extract_strided_slice %18 {offsets = [18, 0], sizes = [1, 30], strides = [1, 1]} : vector<20x30xf32> to vector<1x30xf32>
    %274 = vector.extract_strided_slice %19 {offsets = [18, 0], sizes = [1, 30], strides = [1, 1]} : vector<20x30xf32> to vector<1x30xf32>
    %275 = vector.extract_strided_slice %20 {offsets = [18, 0], sizes = [1, 30], strides = [1, 1]} : vector<20x30xf32> to vector<1x30xf32>
    %276 = vector.broadcast %273 : vector<1x30xf32> to vector<8x30xf32>
    %277 = arith.mulf %272, %276 : vector<8x30xf32>
    %cst_29 = arith.constant dense<0.000000e+00> : vector<8xf32>
    %278 = vector.multi_reduction <add>, %277, %cst_29 [1] : vector<8x30xf32> to vector<8xf32>
    %279 = vector.shape_cast %278 : vector<8xf32> to vector<8x1xf32>
    %280 = vector.broadcast %279 : vector<8x1xf32> to vector<8x30xf32>
    %281 = vector.broadcast %274 : vector<1x30xf32> to vector<8x30xf32>
    %282 = arith.mulf %280, %281 : vector<8x30xf32>
    %283 = arith.subf %272, %282 : vector<8x30xf32>
    %284 = vector.broadcast %275 : vector<1x30xf32> to vector<8x30xf32>
    %285 = arith.addf %283, %284 : vector<8x30xf32>
    %286 = math.absf %285 : vector<8x30xf32>
    %287 = vector.extract_strided_slice %18 {offsets = [19, 0], sizes = [1, 30], strides = [1, 1]} : vector<20x30xf32> to vector<1x30xf32>
    %288 = vector.extract_strided_slice %19 {offsets = [19, 0], sizes = [1, 30], strides = [1, 1]} : vector<20x30xf32> to vector<1x30xf32>
    %289 = vector.extract_strided_slice %20 {offsets = [19, 0], sizes = [1, 30], strides = [1, 1]} : vector<20x30xf32> to vector<1x30xf32>
    %290 = vector.broadcast %287 : vector<1x30xf32> to vector<8x30xf32>
    %291 = arith.mulf %286, %290 : vector<8x30xf32>
    %cst_30 = arith.constant dense<0.000000e+00> : vector<8xf32>
    %292 = vector.multi_reduction <add>, %291, %cst_30 [1] : vector<8x30xf32> to vector<8xf32>
    %293 = vector.shape_cast %292 : vector<8xf32> to vector<8x1xf32>
    %294 = vector.broadcast %293 : vector<8x1xf32> to vector<8x30xf32>
    %295 = vector.broadcast %288 : vector<1x30xf32> to vector<8x30xf32>
    %296 = arith.mulf %294, %295 : vector<8x30xf32>
    %297 = arith.subf %286, %296 : vector<8x30xf32>
    %298 = vector.broadcast %289 : vector<1x30xf32> to vector<8x30xf32>
    %299 = arith.addf %297, %298 : vector<8x30xf32>
    %300 = math.absf %299 : vector<8x30xf32>
    %c0_31 = arith.constant 0 : index
    %c0_32 = arith.constant 0 : index
    %301 = vector.load %arg7[%c0_31, %c0_32] : memref<30x2xf32, #tpu.memory_space<vmem>>, vector<30x2xf32>
    %cst_33 = arith.constant dense<0.000000e+00> : vector<8x2xf32>
    %302 = tpu.matmul %300, %301, %cst_33 {dimension_numbers = #tpu.dot_dimension_numbers<[1], [0], [0], [1], [0, 0, 1, 1], [], []>} : vector<8x30xf32>, vector<30x2xf32>, vector<8x2xf32> -> vector<8x2xf32>
    %c0_34 = arith.constant 0 : index
    %c0_35 = arith.constant 0 : index
    %303 = vector.load %arg8[%c0_34, %c0_35] : memref<1x2xf32, #tpu.memory_space<vmem>>, vector<1x2xf32>
    %304 = vector.broadcast %303 : vector<1x2xf32> to vector<8x2xf32>
    %305 = arith.addf %302, %304 : vector<8x2xf32>
    %c0_36 = arith.constant 0 : index
    %c0_37 = arith.constant 0 : index
    %306 = vector.load %arg9[%c0_36, %c0_37] : memref<8x2xf32, #tpu.memory_space<vmem>>, vector<8x2xf32>
    tpu.vector_store %arg9[%c0_36, %c0_37], %305 {strides = array<i32>} : memref<8x2xf32, #tpu.memory_space<vmem>>, vector<8x2xf32>,
    return
  }
  func.func @transform_0(%arg0: i32) -> (i32, i32) {
    %c0_i32 = arith.constant 0 : i32
    %c0_i32_0 = arith.constant 0 : i32
    return %arg0, %c0_i32 : i32, i32
  }
  func.func @transform_1(%arg0: i32) -> (i32, i32) {
    %c0_i32 = arith.constant 0 : i32
    %c0_i32_0 = arith.constant 0 : i32
    %c0_i32_1 = arith.constant 0 : i32
    return %c0_i32, %c0_i32_0 : i32, i32
  }
  func.func @transform_2(%arg0: i32) -> (i32, i32) {
    %c0_i32 = arith.constant 0 : i32
    %c0_i32_0 = arith.constant 0 : i32
    %c0_i32_1 = arith.constant 0 : i32
    return %c0_i32, %c0_i32_0 : i32, i32
  }
  func.func @transform_3(%arg0: i32) -> (i32, i32) {
    %c0_i32 = arith.constant 0 : i32
    %c0_i32_0 = arith.constant 0 : i32
    %c0_i32_1 = arith.constant 0 : i32
    return %c0_i32, %c0_i32_0 : i32, i32
  }
  func.func @transform_4(%arg0: i32) -> (i32, i32) {
    %c0_i32 = arith.constant 0 : i32
    %c0_i32_0 = arith.constant 0 : i32
    %c0_i32_1 = arith.constant 0 : i32
    return %c0_i32, %c0_i32_0 : i32, i32
  }
  func.func @transform_5(%arg0: i32) -> (i32, i32) {
    %c0_i32 = arith.constant 0 : i32
    %c0_i32_0 = arith.constant 0 : i32
    %c0_i32_1 = arith.constant 0 : i32
    return %c0_i32, %c0_i32_0 : i32, i32
  }
  func.func @transform_6(%arg0: i32) -> (i32, i32) {
    %c0_i32 = arith.constant 0 : i32
    %c0_i32_0 = arith.constant 0 : i32
    %c0_i32_1 = arith.constant 0 : i32
    return %c0_i32, %c0_i32_0 : i32, i32
  }
  func.func @transform_7(%arg0: i32) -> (i32, i32) {
    %c0_i32 = arith.constant 0 : i32
    %c0_i32_0 = arith.constant 0 : i32
    %c0_i32_1 = arith.constant 0 : i32
    return %c0_i32, %c0_i32_0 : i32, i32
  }
  func.func @transform_8(%arg0: i32) -> (i32, i32) {
    %c0_i32 = arith.constant 0 : i32
    %c0_i32_0 = arith.constant 0 : i32
    return %arg0, %c0_i32 : i32, i32
  }
}

</mosaic_0001>

<llo_original>
// kernel: mymethod_forward.1
$region0: #{mymethod_forward.1}
  #allocation0 [shape = 'u32[]', space=smem, size = 0x4, offset = 0x4, fixed_abs, tag = 'smem constant byte address 0x4 - core index']
  #allocation1 [shape = 'u32[144,128]{1,0:T(1,128)}', space=vmem, size = 0x12000, scoped, tag = 'internal scratch']
  %s0 = inlined_call_operand.vmem [shape: f32[8,2], index: 0, kind: input, shape index: {}]
  %s1 = inlined_call_operand.vmem [shape: f32[2,30], index: 1, kind: input, shape index: {}]
  %s2 = inlined_call_operand.vmem [shape: f32[1,30], index: 2, kind: input, shape index: {}]
  %s3 = inlined_call_operand.vmem [shape: f32[20,30], index: 3, kind: input, shape index: {}]
  %s4 = inlined_call_operand.vmem [shape: f32[20,30], index: 4, kind: input, shape index: {}]
  %s5 = inlined_call_operand.vmem [shape: f32[20,30], index: 5, kind: input, shape index: {}]
  %s6 = inlined_call_operand.vmem [shape: f32[30,2], index: 6, kind: input, shape index: {}]
  %s7 = inlined_call_operand.vmem [shape: f32[1,2], index: 7, kind: input, shape index: {}]
  %s8 = inlined_call_operand.vmem [shape: f32[8,2], index: 8, kind: output, shape index: {}]
  %s9 = sld [smem:[#allocation0]]
  $region42: #{mymethod_forward.1} parent=0
    _
  %s11 = ssub.s32 1, %s9
  %s12 = scalar_select 0, %s11, %s9
  // Predicated region
  $region2: #{mymethod_forward.1} parent=0 // pred_check
    _
  $region3: #{mymethod_forward.1} parent=0 // pred_check_branch
    %14 = sbr.rel (0) target = $region5
  $region4: #{mymethod_forward.1} parent=0 // pred_region
    _
  $region5: #{mymethod_forward.1} parent=0 // pred_fallthru
    _
  // Predicated region
  $region6: #{mymethod_forward.1} parent=0 // pred_check
    _
  $region7: #{mymethod_forward.1} parent=0 // pred_check_branch
    %16 = sbr.rel (0) target = $region9
  $region8: #{mymethod_forward.1} parent=0 // pred_region
    _
  $region9: #{mymethod_forward.1} parent=0 // pred_fallthru
    _
  // Predicated region
  $region10: #{mymethod_forward.1} parent=0 // pred_check
    _
  $region11: #{mymethod_forward.1} parent=0 // pred_check_branch
    %18 = sbr.rel (0) target = $region13
  $region12: #{mymethod_forward.1} parent=0 // pred_region
    _
  $region13: #{mymethod_forward.1} parent=0 // pred_fallthru
    _
  // Predicated region
  $region14: #{mymethod_forward.1} parent=0 // pred_check
    _
  $region15: #{mymethod_forward.1} parent=0 // pred_check_branch
    %20 = sbr.rel (0) target = $region17
  $region16: #{mymethod_forward.1} parent=0 // pred_region
    _
  $region17: #{mymethod_forward.1} parent=0 // pred_fallthru
    _
  // Predicated region
  $region18: #{mymethod_forward.1} parent=0 // pred_check
    _
  $region19: #{mymethod_forward.1} parent=0 // pred_check_branch
    %22 = sbr.rel (0) target = $region21
  $region20: #{mymethod_forward.1} parent=0 // pred_region
    _
  $region21: #{mymethod_forward.1} parent=0 // pred_fallthru
    _
  // Predicated region
  $region22: #{mymethod_forward.1} parent=0 // pred_check
    _
  $region23: #{mymethod_forward.1} parent=0 // pred_check_branch
    %24 = sbr.rel (0) target = $region25
  $region24: #{mymethod_forward.1} parent=0 // pred_region
    _
  $region25: #{mymethod_forward.1} parent=0 // pred_fallthru
    _
  // Predicated region
  $region26: #{mymethod_forward.1} parent=0 // pred_check
    _
  $region27: #{mymethod_forward.1} parent=0 // pred_check_branch
    %26 = sbr.rel (0) target = $region29
  $region28: #{mymethod_forward.1} parent=0 // pred_region
    _
  $region29: #{mymethod_forward.1} parent=0 // pred_fallthru
    _
  // Predicated region
  $region30: #{mymethod_forward.1} parent=0 // pred_check
    _
  $region31: #{mymethod_forward.1} parent=0 // pred_check_branch
    %28 = sbr.rel (0) target = $region33
  $region32: #{mymethod_forward.1} parent=0 // pred_region
    _
  $region33: #{mymethod_forward.1} parent=0 // pred_fallthru
    _
  %v29 = vld [vmem:[%s0] sm:$0xff]
  %v30 = vld [vmem:[%s1] sm:$0x3]
  %32 = vset.pattern.permute.xlu0 0
  %33 = vperm.xlu0 %32, %v29
  %v34 = vpop.permute.xlu0 %33
  %v36 = vlaneseq
  %v37 = vshrl.u32 %v36, 7
  %v38 = vsub.s32 0, %v37
  %v39 = vrot.slane %v30, %v38
  %v40 = vmul.f32 %v34, %v39
  %41 = vset.pattern.permute.xlu0 1
  %42 = vperm.xlu0 %41, %v29
  %v43 = vpop.permute.xlu0 %42
  %v45 = vlaneseq
  %v46 = vshrl.u32 %v45, 7
  %v47 = vsub.s32 1, %v46
  %v48 = vrot.slane %v30, %v47
  %v49 = vmul.f32 %v43, %v48
  %v50 = vadd.f32 %v40, %v49
  %v51 = vld [vmem:[%s2] sm:$0x1]
  %v53 = vlaneseq
  %v54 = vshrl.u32 %v53, 7
  %v55 = vsub.s32 0, %v54
  %v56 = vrot.slane %v51, %v55
  %v58 = vadd.f32 %v50, %v56
  %v59 = vmax.f32 %v58, 0.0
  %v60 = vld [vmem:[%s3] sm:$0xff]
  %v61 = vld [vmem:[%s3 + $0x8] sm:$0xff]
  %v62 = vld [vmem:[%s3 + $0x10] sm:$0xf]
  %v63 = vld [vmem:[%s4] sm:$0xff]
  %v64 = vld [vmem:[%s4 + $0x8] sm:$0xff]
  %v65 = vld [vmem:[%s4 + $0x10] sm:$0xf]
  %v66 = vld [vmem:[%s5] sm:$0xff]
  %v67 = vld [vmem:[%s5 + $0x8] sm:$0xff]
  %v68 = vld [vmem:[%s5 + $0x10] sm:$0xf]
  %v69 = vlaneseq
  %v70 = vshrl.u32 %v69, 7
  %v71 = vsub.s32 0, %v70
  %v72 = vrot.slane %v60, %v71
  %v73 = vmul.f32 %v59, %v72
  %vm74 = vcmask 244736
  %v75 = vsel %vm74, %v73, 0.0
  %76 = vadd.xlane.f32.xlu0 %v75
  %v77 = vpop.xlane.xlu0 %76
  %v78 = vlaneseq
  %v79 = vshrl.u32 %v78, 7
  %v80 = vsub.s32 0, %v79
  %v81 = vrot.slane %v63, %v80
  %v82 = vmul.f32 %v77, %v81
  %v83 = vsub.f32 %v59, %v82
  %v84 = vlaneseq
  %v85 = vshrl.u32 %v84, 7
  %v86 = vsub.s32 0, %v85
  %v87 = vrot.slane %v66, %v86
  %v88 = vadd.f32 %v83, %v87
  %v89 = vand.u32 2147483647, %v88
  %v90 = vlaneseq
  %v91 = vshrl.u32 %v90, 7
  %v92 = vsub.s32 1, %v91
  %v93 = vrot.slane %v60, %v92
  %v94 = vmul.f32 %v89, %v93
  %v95 = vsel %vm74, %v94, 0.0
  %96 = vadd.xlane.f32.xlu0 %v95
  %v97 = vpop.xlane.xlu0 %96
  %v98 = vlaneseq
  %v99 = vshrl.u32 %v98, 7
  %v100 = vsub.s32 1, %v99
  %v101 = vrot.slane %v63, %v100
  %v102 = vmul.f32 %v97, %v101
  %v103 = vsub.f32 %v89, %v102
  %v104 = vlaneseq
  %v105 = vshrl.u32 %v104, 7
  %v106 = vsub.s32 1, %v105
  %v107 = vrot.slane %v66, %v106
  %v108 = vadd.f32 %v103, %v107
  %v109 = vand.u32 2147483647, %v108
  %v110 = vlaneseq
  %v111 = vshrl.u32 %v110, 7
  %v112 = vsub.s32 2, %v111
  %v113 = vrot.slane %v60, %v112
  %v114 = vmul.f32 %v109, %v113
  %v115 = vsel %vm74, %v114, 0.0
  %116 = vadd.xlane.f32.xlu0 %v115
  %v117 = vpop.xlane.xlu0 %116
  %v118 = vlaneseq
  %v119 = vshrl.u32 %v118, 7
  %v120 = vsub.s32 2, %v119
  %v121 = vrot.slane %v63, %v120
  %v122 = vmul.f32 %v117, %v121
  %v123 = vsub.f32 %v109, %v122
  %v124 = vlaneseq
  %v125 = vshrl.u32 %v124, 7
  %v126 = vsub.s32 2, %v125
  %v127 = vrot.slane %v66, %v126
  %v128 = vadd.f32 %v123, %v127
  %v129 = vand.u32 2147483647, %v128
  %v130 = vlaneseq
  %v131 = vshrl.u32 %v130, 7
  %v132 = vsub.s32 3, %v131
  %v133 = vrot.slane %v60, %v132
  %v134 = vmul.f32 %v129, %v133
  %v135 = vsel %vm74, %v134, 0.0
  %136 = vadd.xlane.f32.xlu0 %v135
  %v137 = vpop.xlane.xlu0 %136
  %v138 = vlaneseq
  %v139 = vshrl.u32 %v138, 7
  %v140 = vsub.s32 3, %v139
  %v141 = vrot.slane %v63, %v140
  %v142 = vmul.f32 %v137, %v141
  %v143 = vsub.f32 %v129, %v142
  %v144 = vlaneseq
  %v145 = vshrl.u32 %v144, 7
  %v146 = vsub.s32 3, %v145
  %v147 = vrot.slane %v66, %v146
  %v148 = vadd.f32 %v143, %v147
  %v149 = vand.u32 2147483647, %v148
  %v150 = vlaneseq
  %v151 = vshrl.u32 %v150, 7
  %v152 = vsub.s32 4, %v151
  %v153 = vrot.slane %v60, %v152
  %v154 = vmul.f32 %v149, %v153
  %v155 = vsel %vm74, %v154, 0.0
  %156 = vadd.xlane.f32.xlu0 %v155
  %v157 = vpop.xlane.xlu0 %156
  %v158 = vlaneseq
  %v159 = vshrl.u32 %v158, 7
  %v160 = vsub.s32 4, %v159
  %v161 = vrot.slane %v63, %v160
  %v162 = vmul.f32 %v157, %v161
  %v163 = vsub.f32 %v149, %v162
  %v164 = vlaneseq
  %v165 = vshrl.u32 %v164, 7
  %v166 = vsub.s32 4, %v165
  %v167 = vrot.slane %v66, %v166
  %v168 = vadd.f32 %v163, %v167
  %v169 = vand.u32 2147483647, %v168
  %v170 = vlaneseq
  %v171 = vshrl.u32 %v170, 7
  %v172 = vsub.s32 5, %v171
  %v173 = vrot.slane %v60, %v172
  %v174 = vmul.f32 %v169, %v173
  %v175 = vsel %vm74, %v174, 0.0
  %176 = vadd.xlane.f32.xlu0 %v175
  %v177 = vpop.xlane.xlu0 %176
  %v178 = vlaneseq
  %v179 = vshrl.u32 %v178, 7
  %v180 = vsub.s32 5, %v179
  %v181 = vrot.slane %v63, %v180
  %v182 = vmul.f32 %v177, %v181
  %v183 = vsub.f32 %v169, %v182
  %v184 = vlaneseq
  %v185 = vshrl.u32 %v184, 7
  %v186 = vsub.s32 5, %v185
  %v187 = vrot.slane %v66, %v186
  %v188 = vadd.f32 %v183, %v187
  %v189 = vand.u32 2147483647, %v188
  %v190 = vlaneseq
  %v191 = vshrl.u32 %v190, 7
  %v192 = vsub.s32 6, %v191
  %v193 = vrot.slane %v60, %v192
  %v194 = vmul.f32 %v189, %v193
  %v195 = vsel %vm74, %v194, 0.0
  %196 = vadd.xlane.f32.xlu0 %v195
  %v197 = vpop.xlane.xlu0 %196
  %v198 = vlaneseq
  %v199 = vshrl.u32 %v198, 7
  %v200 = vsub.s32 6, %v199
  %v201 = vrot.slane %v63, %v200
  %v202 = vmul.f32 %v197, %v201
  %v203 = vsub.f32 %v189, %v202
  %v204 = vlaneseq
  %v205 = vshrl.u32 %v204, 7
  %v206 = vsub.s32 6, %v205
  %v207 = vrot.slane %v66, %v206
  %v208 = vadd.f32 %v203, %v207
  %v209 = vand.u32 2147483647, %v208
  %v210 = vlaneseq
  %v211 = vshrl.u32 %v210, 7
  %v212 = vsub.s32 7, %v211
  %v213 = vrot.slane %v60, %v212
  %v214 = vmul.f32 %v209, %v213
  %v215 = vsel %vm74, %v214, 0.0
  %216 = vadd.xlane.f32.xlu0 %v215
  %v217 = vpop.xlane.xlu0 %216
  %v218 = vlaneseq
  %v219 = vshrl.u32 %v218, 7
  %v220 = vsub.s32 7, %v219
  %v221 = vrot.slane %v63, %v220
  %v222 = vmul.f32 %v217, %v221
  %v223 = vsub.f32 %v209, %v222
  %v224 = vlaneseq
  %v225 = vshrl.u32 %v224, 7
  %v226 = vsub.s32 7, %v225
  %v227 = vrot.slane %v66, %v226
  %v228 = vadd.f32 %v223, %v227
  %v229 = vand.u32 2147483647, %v228
  %v230 = vlaneseq
  %v231 = vshrl.u32 %v230, 7
  %v232 = vsub.s32 0, %v231
  %v233 = vrot.slane %v61, %v232
  %v234 = vmul.f32 %v229, %v233
  %v235 = vsel %vm74, %v234, 0.0
  %236 = vadd.xlane.f32.xlu0 %v235
  %v237 = vpop.xlane.xlu0 %236
  %v238 = vlaneseq
  %v239 = vshrl.u32 %v238, 7
  %v240 = vsub.s32 0, %v239
  %v241 = vrot.slane %v64, %v240
  %v242 = vmul.f32 %v237, %v241
  %v243 = vsub.f32 %v229, %v242
  %v244 = vlaneseq
  %v245 = vshrl.u32 %v244, 7
  %v246 = vsub.s32 0, %v245
  %v247 = vrot.slane %v67, %v246
  %v248 = vadd.f32 %v243, %v247
  %v249 = vand.u32 2147483647, %v248
  %v250 = vlaneseq
  %v251 = vshrl.u32 %v250, 7
  %v252 = vsub.s32 1, %v251
  %v253 = vrot.slane %v61, %v252
  %v254 = vmul.f32 %v249, %v253
  %v255 = vsel %vm74, %v254, 0.0
  %256 = vadd.xlane.f32.xlu0 %v255
  %v257 = vpop.xlane.xlu0 %256
  %v258 = vlaneseq
  %v259 = vshrl.u32 %v258, 7
  %v260 = vsub.s32 1, %v259
  %v261 = vrot.slane %v64, %v260
  %v262 = vmul.f32 %v257, %v261
  %v263 = vsub.f32 %v249, %v262
  %v264 = vlaneseq
  %v265 = vshrl.u32 %v264, 7
  %v266 = vsub.s32 1, %v265
  %v267 = vrot.slane %v67, %v266
  %v268 = vadd.f32 %v263, %v267
  %v269 = vand.u32 2147483647, %v268
  %v270 = vlaneseq
  %v271 = vshrl.u32 %v270, 7
  %v272 = vsub.s32 2, %v271
  %v273 = vrot.slane %v61, %v272
  %v274 = vmul.f32 %v269, %v273
  %v275 = vsel %vm74, %v274, 0.0
  %276 = vadd.xlane.f32.xlu0 %v275
  %v277 = vpop.xlane.xlu0 %276
  %v278 = vlaneseq
  %v279 = vshrl.u32 %v278, 7
  %v280 = vsub.s32 2, %v279
  %v281 = vrot.slane %v64, %v280
  %v282 = vmul.f32 %v277, %v281
  %v283 = vsub.f32 %v269, %v282
  %v284 = vlaneseq
  %v285 = vshrl.u32 %v284, 7
  %v286 = vsub.s32 2, %v285
  %v287 = vrot.slane %v67, %v286
  %v288 = vadd.f32 %v283, %v287
  %v289 = vand.u32 2147483647, %v288
  %v290 = vlaneseq
  %v291 = vshrl.u32 %v290, 7
  %v292 = vsub.s32 3, %v291
  %v293 = vrot.slane %v61, %v292
  %v294 = vmul.f32 %v289, %v293
  %v295 = vsel %vm74, %v294, 0.0
  %296 = vadd.xlane.f32.xlu0 %v295
  %v297 = vpop.xlane.xlu0 %296
  %v298 = vlaneseq
  %v299 = vshrl.u32 %v298, 7
  %v300 = vsub.s32 3, %v299
  %v301 = vrot.slane %v64, %v300
  %v302 = vmul.f32 %v297, %v301
  %v303 = vsub.f32 %v289, %v302
  %v304 = vlaneseq
  %v305 = vshrl.u32 %v304, 7
  %v306 = vsub.s32 3, %v305
  %v307 = vrot.slane %v67, %v306
  %v308 = vadd.f32 %v303, %v307
  %v309 = vand.u32 2147483647, %v308
  %v310 = vlaneseq
  %v311 = vshrl.u32 %v310, 7
  %v312 = vsub.s32 4, %v311
  %v313 = vrot.slane %v61, %v312
  %v314 = vmul.f32 %v309, %v313
  %v315 = vsel %vm74, %v314, 0.0
  %316 = vadd.xlane.f32.xlu0 %v315
  %v317 = vpop.xlane.xlu0 %316
  %v318 = vlaneseq
  %v319 = vshrl.u32 %v318, 7
  %v320 = vsub.s32 4, %v319
  %v321 = vrot.slane %v64, %v320
  %v322 = vmul.f32 %v317, %v321
  %v323 = vsub.f32 %v309, %v322
  %v324 = vlaneseq
  %v325 = vshrl.u32 %v324, 7
  %v326 = vsub.s32 4, %v325
  %v327 = vrot.slane %v67, %v326
  %v328 = vadd.f32 %v323, %v327
  %v329 = vand.u32 2147483647, %v328
  %v330 = vlaneseq
  %v331 = vshrl.u32 %v330, 7
  %v332 = vsub.s32 5, %v331
  %v333 = vrot.slane %v61, %v332
  %v334 = vmul.f32 %v329, %v333
  %v335 = vsel %vm74, %v334, 0.0
  %336 = vadd.xlane.f32.xlu0 %v335
  %v337 = vpop.xlane.xlu0 %336
  %v338 = vlaneseq
  %v339 = vshrl.u32 %v338, 7
  %v340 = vsub.s32 5, %v339
  %v341 = vrot.slane %v64, %v340
  %v342 = vmul.f32 %v337, %v341
  %v343 = vsub.f32 %v329, %v342
  %v344 = vlaneseq
  %v345 = vshrl.u32 %v344, 7
  %v346 = vsub.s32 5, %v345
  %v347 = vrot.slane %v67, %v346
  %v348 = vadd.f32 %v343, %v347
  %v349 = vand.u32 2147483647, %v348
  %v350 = vlaneseq
  %v351 = vshrl.u32 %v350, 7
  %v352 = vsub.s32 6, %v351
  %v353 = vrot.slane %v61, %v352
  %v354 = vmul.f32 %v349, %v353
  %v355 = vsel %vm74, %v354, 0.0
  %356 = vadd.xlane.f32.xlu0 %v355
  %v357 = vpop.xlane.xlu0 %356
  %v358 = vlaneseq
  %v359 = vshrl.u32 %v358, 7
  %v360 = vsub.s32 6, %v359
  %v361 = vrot.slane %v64, %v360
  %v362 = vmul.f32 %v357, %v361
  %v363 = vsub.f32 %v349, %v362
  %v364 = vlaneseq
  %v365 = vshrl.u32 %v364, 7
  %v366 = vsub.s32 6, %v365
  %v367 = vrot.slane %v67, %v366
  %v368 = vadd.f32 %v363, %v367
  %v369 = vand.u32 2147483647, %v368
  %v370 = vlaneseq
  %v371 = vshrl.u32 %v370, 7
  %v372 = vsub.s32 7, %v371
  %v373 = vrot.slane %v61, %v372
  %v374 = vmul.f32 %v369, %v373
  %v375 = vsel %vm74, %v374, 0.0
  %376 = vadd.xlane.f32.xlu0 %v375
  %v377 = vpop.xlane.xlu0 %376
  %v378 = vlaneseq
  %v379 = vshrl.u32 %v378, 7
  %v380 = vsub.s32 7, %v379
  %v381 = vrot.slane %v64, %v380
  %v382 = vmul.f32 %v377, %v381
  %v383 = vsub.f32 %v369, %v382
  %v384 = vlaneseq
  %v385 = vshrl.u32 %v384, 7
  %v386 = vsub.s32 7, %v385
  %v387 = vrot.slane %v67, %v386
  %v388 = vadd.f32 %v383, %v387
  %v389 = vand.u32 2147483647, %v388
  %v390 = vlaneseq
  %v391 = vshrl.u32 %v390, 7
  %v392 = vsub.s32 0, %v391
  %v393 = vrot.slane %v62, %v392
  %v394 = vmul.f32 %v389, %v393
  %v395 = vsel %vm74, %v394, 0.0
  %396 = vadd.xlane.f32.xlu0 %v395
  %v397 = vpop.xlane.xlu0 %396
  %v398 = vlaneseq
  %v399 = vshrl.u32 %v398, 7
  %v400 = vsub.s32 0, %v399
  %v401 = vrot.slane %v65, %v400
  %v402 = vmul.f32 %v397, %v401
  %v403 = vsub.f32 %v389, %v402
  %v404 = vlaneseq
  %v405 = vshrl.u32 %v404, 7
  %v406 = vsub.s32 0, %v405
  %v407 = vrot.slane %v68, %v406
  %v408 = vadd.f32 %v403, %v407
  %v409 = vand.u32 2147483647, %v408
  %v410 = vlaneseq
  %v411 = vshrl.u32 %v410, 7
  %v412 = vsub.s32 1, %v411
  %v413 = vrot.slane %v62, %v412
  %v414 = vmul.f32 %v409, %v413
  %v415 = vsel %vm74, %v414, 0.0
  %416 = vadd.xlane.f32.xlu0 %v415
  %v417 = vpop.xlane.xlu0 %416
  %v418 = vlaneseq
  %v419 = vshrl.u32 %v418, 7
  %v420 = vsub.s32 1, %v419
  %v421 = vrot.slane %v65, %v420
  %v422 = vmul.f32 %v417, %v421
  %v423 = vsub.f32 %v409, %v422
  %v424 = vlaneseq
  %v425 = vshrl.u32 %v424, 7
  %v426 = vsub.s32 1, %v425
  %v427 = vrot.slane %v68, %v426
  %v428 = vadd.f32 %v423, %v427
  %v429 = vand.u32 2147483647, %v428
  %v430 = vlaneseq
  %v431 = vshrl.u32 %v430, 7
  %v432 = vsub.s32 2, %v431
  %v433 = vrot.slane %v62, %v432
  %v434 = vmul.f32 %v429, %v433
  %v435 = vsel %vm74, %v434, 0.0
  %436 = vadd.xlane.f32.xlu0 %v435
  %v437 = vpop.xlane.xlu0 %436
  %v438 = vlaneseq
  %v439 = vshrl.u32 %v438, 7
  %v440 = vsub.s32 2, %v439
  %v441 = vrot.slane %v65, %v440
  %v442 = vmul.f32 %v437, %v441
  %v443 = vsub.f32 %v429, %v442
  %v444 = vlaneseq
  %v445 = vshrl.u32 %v444, 7
  %v446 = vsub.s32 2, %v445
  %v447 = vrot.slane %v68, %v446
  %v448 = vadd.f32 %v443, %v447
  %v449 = vand.u32 2147483647, %v448
  %v450 = vlaneseq
  %v451 = vshrl.u32 %v450, 7
  %v452 = vsub.s32 3, %v451
  %v453 = vrot.slane %v62, %v452
  %v454 = vmul.f32 %v449, %v453
  %v455 = vsel %vm74, %v454, 0.0
  %456 = vadd.xlane.f32.xlu0 %v455
  %v457 = vpop.xlane.xlu0 %456
  %v458 = vlaneseq
  %v459 = vshrl.u32 %v458, 7
  %v460 = vsub.s32 3, %v459
  %v461 = vrot.slane %v65, %v460
  %v462 = vmul.f32 %v457, %v461
  %v463 = vsub.f32 %v449, %v462
  %v464 = vlaneseq
  %v465 = vshrl.u32 %v464, 7
  %v466 = vsub.s32 3, %v465
  %v467 = vrot.slane %v68, %v466
  %v468 = vadd.f32 %v463, %v467
  %v469 = vand.u32 2147483647, %v468
  %v470 = vld [vmem:[%s6] sm:$0xff]
  %v471 = vld [vmem:[%s6 + $0x8] sm:$0xff]
  %v472 = vld [vmem:[%s6 + $0x10] sm:$0xff]
  %v473 = vld [vmem:[%s6 + $0x18] sm:$0x3f]
  %v474 = vld [vmem:[%s7] sm:$0x1]
  %v476 = vlaneseq
  %v477 = vshrl.u32 %v476, 7
  %v478 = vsub.s32 0, %v477
  %v479 = vrot.slane %v474, %v478
  %v482 = vsel %vm74, %v469, 0
  %vm484 = vcmask 1045504
  %v486 = vsel %vm484, %v473, 0
  %488 = vmatprep.subr.mxu0 0.0
  %489 = vmatpush1.msra.mxu0 0.0
  %490 = vmatprep.subr.mxu0 0.0
  %491 = vmatpush1.msra.mxu0 0.0
  %492 = vmatprep.subr.mxu0 0.0
  %493 = vmatpush1.msra.mxu0 0.0
  %494 = vmatprep.subr.mxu0 0.0
  %495 = vmatpush1.msra.mxu0 0.0
  %496 = vmatprep.subr.mxu0 0.0
  %497 = vmatpush1.msra.mxu0 0.0
  %498 = vmatprep.subr.mxu0 0.0
  %499 = vmatpush1.msra.mxu0 0.0
  %500 = vmatprep.subr.mxu0 0.0
  %501 = vmatpush1.msra.mxu0 0.0
  %502 = vmatprep.subr.mxu0 0.0
  %503 = vmatpush1.msra.mxu0 0.0
  %504 = vmatprep.subr.mxu0 0.0
  %505 = vmatpush1.msra.mxu0 0.0
  %506 = vmatprep.subr.mxu0 0.0
  %507 = vmatpush1.msra.mxu0 0.0
  %508 = vmatprep.subr.mxu0 0.0
  %509 = vmatpush1.msra.mxu0 0.0
  %510 = vmatprep.subr.mxu0 0.0
  %511 = vmatpush1.msra.mxu0 0.0
  %512 = vmatprep.subr.mxu0 0.0
  %513 = vmatpush1.msra.mxu0 %v486
  %514 = vmatprep.subr.mxu0 0.0
  %515 = vmatpush1.msra.mxu0 %v472
  %516 = vmatprep.subr.mxu0 0.0
  %517 = vmatpush1.msra.mxu0 %v471
  %518 = vmatprep.subr.mxu0 0.0
  %519 = vmatpush1.msra.mxu0 %v470
  %520 = vmatprep.subr.mxu0 0.0
  %521 = vmatpush2.msra.mxu0 0.0
  %522 = vmatprep.subr.mxu0 0.0
  %523 = vmatpush2.msra.mxu0 0.0
  %524 = vmatprep.subr.mxu0 0.0
  %525 = vmatpush2.msra.mxu0 0.0
  %526 = vmatprep.subr.mxu0 0.0
  %527 = vmatpush2.msra.mxu0 0.0
  %528 = vmatprep.subr.mxu0 0.0
  %529 = vmatpush2.msra.mxu0 0.0
  %530 = vmatprep.subr.mxu0 0.0
  %531 = vmatpush2.msra.mxu0 0.0
  %532 = vmatprep.subr.mxu0 0.0
  %533 = vmatpush2.msra.mxu0 0.0
  %534 = vmatprep.subr.mxu0 0.0
  %535 = vmatpush2.msra.mxu0 0.0
  %536 = vmatprep.subr.mxu0 0.0
  %537 = vmatpush2.msra.mxu0 0.0
  %538 = vmatprep.subr.mxu0 0.0
  %539 = vmatpush2.msra.mxu0 0.0
  %540 = vmatprep.subr.mxu0 0.0
  %541 = vmatpush2.msra.mxu0 0.0
  %542 = vmatprep.subr.mxu0 0.0
  %543 = vmatpush2.msra.mxu0 0.0
  %544 = vmatprep.subr.mxu0 0.0
  %545 = vmatpush2.msra.mxu0 0.0
  %546 = vmatprep.subr.mxu0 0.0
  %547 = vmatpush2.msra.mxu0 0.0
  %548 = vmatprep.subr.mxu0 0.0
  %549 = vmatpush2.msra.mxu0 0.0
  %550 = vmatprep.subr.mxu0 0.0
  %551 = vmatpush2.msra.mxu0 0.0
  %552 = vmatprep.mubr.f32.mxu0 0.0
  %553 = vmatmul.mubr.f32.gmra.mxu0 %v482
  %v554 = vpop.f32.mrf.mxu0
  %v555 = vadd.f32 %v479, %v554
  %v556 = vpop.f32.mrf.mxu0
  %557 = vdwg.mxu0
  %vm558 = vcmask 15360
  %559 = vst.msk [vmem:[%s8] sm:$0xff] %vm558, %v555
  // Predicated region
  $region34: #{mymethod_forward.1} parent=0 // pred_check
    _
  $region35: #{mymethod_forward.1} parent=0 // pred_check_branch
    %561 = sbr.rel (0) target = $region37
  $region36: #{mymethod_forward.1} parent=0 // pred_region
    _
  $region37: #{mymethod_forward.1} parent=0 // pred_fallthru
    _
  // Predicated region
  $region38: #{mymethod_forward.1} parent=0 // pred_check
    _
  $region39: #{mymethod_forward.1} parent=0 // pred_check_branch
    %563 = sbr.rel (0) target = $region41
  $region40: #{mymethod_forward.1} parent=0 // pred_region
    _
  $region41: #{mymethod_forward.1} parent=0 // pred_fallthru
    _

</llo_original>
